<compile_context>
chip_gen: v5e
topology: v5e:2x2
jax: 0.10.0
libtpu: 0.0.40
codegen_flags: <defaults>
</compile_context>

<pallas_src>
import functools

import jax
import jax.numpy as jnp
from jax.experimental import pallas as pl
from jax.experimental.pallas import tpu as pltpu


# ----------------------------------------------------------------------------
# Kernel
# ----------------------------------------------------------------------------
def _quant_act_kernel(x_ref, o_ref, *, n_bits: int, H: float):
    # Upcast to f32: mem-bound kernel, so the extra VPU work is free, and it keeps
    # round-half-to-even behaviour identical to an f32 reference for bf16 inputs
    # (also avoids v5e's lack of bf16 VALU).
    x = x_ref[...].astype(jnp.float32)
    if n_bits == 1:
        # Sign-binarization branch of Quantize(). hardtanh preserves sign and zero,
        # so hardtanh(x) > 0  <=>  x > 0 (x == 0 maps to -H, matching torch.where).
        q = jnp.where(x > 0, jnp.float32(H), jnp.float32(-H))
    else:
        levels = float(2 ** n_bits - 1)
        # Fused clamp: hardtanh [-1,1] composed with quant clamp [-H,H]
        # == clamp to the intersection (valid for H > 0).
        lo = max(-1.0, -float(H))
        hi = min(1.0, float(H))
        scale = levels / (2.0 * float(H))        # Python constant (no runtime divide)
        inv_scale = (2.0 * float(H)) / levels    # Python constant
        y = jnp.clip(x, lo, hi)
        # jnp.round matches torch.round (round-half-to-even).
        q = jnp.round((y + H) * scale) * inv_scale - H
    # NOTE: for a partial tail tile the rows past the array end contain garbage that
    # flows through the arithmetic; that is harmless because Pallas masks the
    # out-of-bounds output writes. Do not "optimize" the partial tile away.
    o_ref[...] = q.astype(o_ref.dtype)


def _quant_act_jnp(x, n_bits: int, H: float):
    """Fused single-pass fallback for shapes not divisible by 128 elements."""
    xf = x.astype(jnp.float32)
    if n_bits == 1:
        q = jnp.where(xf > 0, jnp.float32(H), jnp.float32(-H))
    else:
        levels = float(2 ** n_bits - 1)
        lo = max(-1.0, -float(H))
        hi = min(1.0, float(H))
        y = jnp.clip(xf, lo, hi)
        q = jnp.round((y + H) * (levels / (2.0 * H))) * ((2.0 * H) / levels) - H
    return q.astype(x.dtype)


# ----------------------------------------------------------------------------
# Wrapper
# ----------------------------------------------------------------------------
def quantize_act_layer(x, n_bits: int = 2, H: float = 1.0):
    """Forward of QuantizeActLayer. x: any shape (e.g. NCHW)."""
    orig_shape = x.shape
    orig_dtype = x.dtype
    n = x.size

    # Widest lane-dense width (multiple of 128) that divides n -> no pad/slice.
    lane = None
    for cand in (2048, 1024, 512, 256, 128):
        if n % cand == 0:
            lane = cand
            break

    if lane is None or n == 0:
        # Rare shapes: a fused XLA elementwise op is a single HBM pass, strictly
        # better than pad + Pallas + slice (which would triple HBM traffic).
        return _quant_act_jnp(x, n_bits, H)

    rows = n // lane
    x2d = jnp.reshape(x, (rows, lane))  # contiguous reshape: metadata only

    itemsize = jnp.dtype(orig_dtype).itemsize
    # Sublane multiple for nicely-aligned tiles (f32: 8, bf16: 16, int8: 32).
    sub = 8 if itemsize >= 4 else (16 if itemsize == 2 else 32)

    slab_bytes = rows * lane * itemsize
    # ~4 MiB tiles: in + out, double-buffered => ~16 MiB pipeline footprint.
    target_bytes = 4 * 1024 * 1024

    if slab_bytes <= 512 * 1024 or rows <= sub:
        # Tiny slab: single full-extent block (pipelining overhead would dominate).
        tr = rows
        grid = (1,)
    else:
        tr = max(sub, (target_bytes // (lane * itemsize)) // sub * sub)
        steps = pl.cdiv(rows, tr)
        # Never run a mid/large slab as one step (kills DMA/compute overlap and
        # v7x dual-TC sharding); keep the step count even so both v7x cores get a
        # balanced share.
        steps = max(2, steps)
        if steps % 2:
            steps += 1
        tr = min(rows, ((pl.cdiv(rows, steps) + sub - 1) // sub) * sub)
        grid = (pl.cdiv(rows, tr),)

    kernel = functools.partial(_quant_act_kernel, n_bits=int(n_bits), H=float(H))

    out2d = pl.pallas_call(
        kernel,
        out_shape=jax.ShapeDtypeStruct((rows, lane), orig_dtype),
        grid_spec=pltpu.PrefetchScalarGridSpec(
            num_scalar_prefetch=0,
            grid=grid,
            in_specs=[pl.BlockSpec((tr, lane), lambda i: (i, 0))],
            out_specs=pl.BlockSpec((tr, lane), lambda i: (i, 0)),
        ),
        compiler_params=pltpu.CompilerParams(
            dimension_semantics=("parallel",),
            vmem_limit_bytes=32 * 1024 * 1024,
        ),
    )(x2d)

    return jnp.reshape(out2d, orig_shape)


# ----------------------------------------------------------------------------
# Reference (pure jnp) for verification
# ----------------------------------------------------------------------------
def _reference(x, n_bits=2, H=1.0):
    y = jnp.clip(x.astype(jnp.float32), -1.0, 1.0)  # hardtanh
    if n_bits == 1:
        return jnp.where(y > 0, H, -H).astype(x.dtype)
    levels = float(2 ** n_bits - 1)
    q = (jnp.round((jnp.clip(y, -H, H) + H) * levels / (2.0 * H))
         * (2.0 * H) / levels - H)
    return q.astype(x.dtype)


if __name__ == "__main__":
    key = jax.random.PRNGKey(0)

    # Small NCHW input consistent with a conv-activation module.
    x = jax.random.normal(key, (2, 4, 16, 16), dtype=jnp.float32) * 2.0

    # Default n_bits=2 path.
    out = jax.block_until_ready(quantize_act_layer(x, n_bits=2, H=1.0))
    ref = _reference(x, n_bits=2, H=1.0)
    assert out.shape == x.shape and out.dtype == x.dtype
    assert jnp.allclose(out, ref, atol=1e-6), "mismatch vs reference (n_bits=2)"

    # 1-bit sign-binarization branch.
    out1 = jax.block_until_ready(quantize_act_layer(x, n_bits=1, H=1.0))
    ref1 = _reference(x, n_bits=1, H=1.0)
    assert jnp.allclose(out1, ref1, atol=1e-6), "mismatch vs reference (n_bits=1)"

    # Larger activation to exercise the multi-step (pipelined, even-step) grid path.
    key2 = jax.random.PRNGKey(1)
    xl = jax.random.normal(key2, (2, 32, 64, 64), dtype=jnp.float32) * 2.0
    outl = jax.block_until_ready(quantize_act_layer(xl, n_bits=2, H=1.0))
    refl = _reference(xl, n_bits=2, H=1.0)
    assert jnp.allclose(outl, refl, atol=1e-6), "mismatch vs reference (large)"

    # Shape not divisible by 128 -> fused jnp fallback path.
    key3 = jax.random.PRNGKey(2)
    xs = jax.random.normal(key3, (3, 5, 7), dtype=jnp.float32) * 2.0
    outs = jax.block_until_ready(quantize_act_layer(xs, n_bits=2, H=1.0))
    refs = _reference(xs, n_bits=2, H=1.0)
    assert jnp.allclose(outs, refs, atol=1e-6), "mismatch vs reference (fallback)"

    print("KERNEL_OK")
</pallas_src>

<mosaic_0001>
module attributes {stable_mosaic.version = 11 : i64} {
  func.func @_quant_act_kernel(%arg0: i32, %arg1: memref<1x2048xf32, #tpu.memory_space<vmem>>, %arg2: memref<1x2048xf32, #tpu.memory_space<vmem>>) attributes {dimension_semantics = [#tpu.dimension_semantics<parallel>], iteration_bounds = array<i64: 1>, scalar_prefetch = 0 : i64, scratch_operands = 0 : i64, tpu.core_type = #tpu.core_type<tc>, window_params = [{transform_indices = @transform_0, window_bounds = array<i64: 1, 2048>}, {transform_indices = @transform_1, window_bounds = array<i64: 1, 2048>}]} {
    %c0 = arith.constant 0 : index
    %c0_0 = arith.constant 0 : index
    %0 = vector.load %arg1[%c0, %c0_0] : memref<1x2048xf32, #tpu.memory_space<vmem>>, vector<1x2048xf32>
    %cst = arith.constant -1.000000e+00 : f32
    %cst_1 = arith.constant 1.000000e+00 : f32
    %1 = vector.broadcast %cst : f32 to vector<1x2048xf32>
    %2 = arith.maximumf %1, %0 : vector<1x2048xf32>
    %3 = vector.broadcast %cst_1 : f32 to vector<1x2048xf32>
    %4 = arith.minimumf %3, %2 : vector<1x2048xf32>
    %cst_2 = arith.constant 1.000000e+00 : f32
    %5 = vector.broadcast %cst_2 : f32 to vector<1x2048xf32>
    %6 = arith.addf %4, %5 : vector<1x2048xf32>
    %cst_3 = arith.constant 1.500000e+00 : f32
    %7 = vector.broadcast %cst_3 : f32 to vector<1x2048xf32>
    %8 = arith.mulf %6, %7 : vector<1x2048xf32>
    %9 = math.roundeven %8 : vector<1x2048xf32>
    %cst_4 = arith.constant 0.666666686 : f32
    %10 = vector.broadcast %cst_4 : f32 to vector<1x2048xf32>
    %11 = arith.mulf %9, %10 : vector<1x2048xf32>
    %cst_5 = arith.constant 1.000000e+00 : f32
    %12 = vector.broadcast %cst_5 : f32 to vector<1x2048xf32>
    %13 = arith.subf %11, %12 : vector<1x2048xf32>
    %c0_6 = arith.constant 0 : index
    %c0_7 = arith.constant 0 : index
    %14 = vector.load %arg2[%c0_6, %c0_7] : memref<1x2048xf32, #tpu.memory_space<vmem>>, vector<1x2048xf32>
    tpu.vector_store %arg2[%c0_6, %c0_7], %13 {strides = array<i32>} : memref<1x2048xf32, #tpu.memory_space<vmem>>, vector<1x2048xf32>,
    return
  }
  func.func @transform_0(%arg0: i32) -> (i32, i32) {
    %c0_i32 = arith.constant 0 : i32
    %c0_i32_0 = arith.constant 0 : i32
    return %arg0, %c0_i32 : i32, i32
  }
  func.func @transform_1(%arg0: i32) -> (i32, i32) {
    %c0_i32 = arith.constant 0 : i32
    %c0_i32_0 = arith.constant 0 : i32
    return %arg0, %c0_i32 : i32, i32
  }
}

</mosaic_0001>

<llo_original>
// kernel: tpu_custom_call.1
$region0: #{tpu_custom_call.1}
  #allocation0 [shape = 'u32[]', space=smem, size = 0x4, offset = 0x4, fixed_abs, tag = 'smem constant byte address 0x4 - core index']
  #allocation1 [shape = 'u32[72,128]{1,0:T(1,128)}', space=vmem, size = 0x9000, scoped, tag = 'internal scratch']
  %s0 = inlined_call_operand.hbm [shape: f32[1,2048], index: 0, kind: input, shape index: {}]
  %s1 = inlined_call_operand.hbm [shape: f32[1,2048], index: 1, kind: output, shape index: {}]
  %s2 = sld [smem:[#allocation0]]
  $region18: #{tpu_custom_call.1} parent=0
    _
  %s4 = ssub.s32 1, %s2
  %s5 = scalar_select 0, %s4, %s2
  $region1: #{tpu_custom_call.1} parent=0
    #allocation2 [shape = 'u8[8192]{0}', space=vmem, size = 0x2000, scoped, tag = 'input window, operand 0, single buffered']
    #allocation3 [shape = 's32[1]{0}', space=sflag, size = 0x4, scoped, tag = 'scoped memory for tpu_custom_call.1']
    #allocation4 [shape = 's32[1]{0}', space=sflag, size = 0x4, scoped, tag = 'scoped memory for tpu_custom_call.1']
    #allocation5 [shape = 'u8[8192]{0}', space=vmem, size = 0x2000, scoped, tag = 'output window, operand 0, single buffered']
    %6 = vsyncpa [#allocation3], 0
    %7 = vsyncpa [#allocation4], 0
    // Predicated region
    $region2: #{tpu_custom_call.1} parent=1 // pred_check
      _
    $region3: #{tpu_custom_call.1} parent=1 // pred_check_branch
      %9 = sbr.rel (0) target = $region5
    $region4: #{tpu_custom_call.1} parent=1 // pred_region
      %11 = vsyncadd [#allocation3], 0
      %s13 = sshll.u32 %s0, 4
      %s14 = int_to_ptr.hbm [resolvable:$true] %s13
      %s15 = sshll.u32 [#allocation2], 4
      %s16 = int_to_ptr.vmem [resolvable:$true] %s15
      %18 = dma.hbm_to_vmem [thread:$0]  %s14, 256, %s16, [#allocation3]
    $region5: #{tpu_custom_call.1} parent=1 // pred_fallthru
      _
    // Predicated region
    $region6: #{tpu_custom_call.1} parent=1 // pred_check
      _
    $region7: #{tpu_custom_call.1} parent=1 // pred_check_branch
      %20 = sbr.rel (0) target = $region9
    $region8: #{tpu_custom_call.1} parent=1 // pred_region
      %22 = dma.done [#allocation3], 256
    $region9: #{tpu_custom_call.1} parent=1 // pred_fallthru
      _
    %v23 = vld [vmem:[#allocation2] sm:$0xff]
    %v24 = vld [vmem:[#allocation2 + $0x8] sm:$0xff]
    %v25 = vmax.f32 %v23, -1.0
    %v26 = vmax.f32 %v24, -1.0
    %v27 = vmin.f32 %v25, 1.0
    %v28 = vmin.f32 %v26, 1.0
    %v29 = vadd.f32 %v27, 1.0
    %v30 = vadd.f32 %v28, 1.0
    %v31 = vmul.f32 %v29, 1.5
    %v32 = vmul.f32 %v30, 1.5
    %v33 = vround.ne.pseudo %v31
    %v34 = vround.ne.pseudo %v32
    %v35 = vmul.f32 %v33, 0.6666667
    %v36 = vmul.f32 %v34, 0.6666667
    %v37 = vsub.f32 %v35, 1.0
    %v38 = vsub.f32 %v36, 1.0
    %39 = vst [vmem:[#allocation5] sm:$0xff] %v37
    %40 = vst [vmem:[#allocation5 + $0x8] sm:$0xff] %v38
    // Predicated region
    $region10: #{tpu_custom_call.1} parent=1 // pred_check
      _
    $region11: #{tpu_custom_call.1} parent=1 // pred_check_branch
      %42 = sbr.rel (0) target = $region13
    $region12: #{tpu_custom_call.1} parent=1 // pred_region
      %44 = vsyncadd [#allocation4], 0
      %s46 = sshll.u32 [#allocation5], 4
      %s47 = int_to_ptr.vmem [resolvable:$true] %s46
      %s48 = sshll.u32 %s1, 4
      %s49 = int_to_ptr.hbm [resolvable:$true] %s48
      %51 = dma.vmem_to_hbm [thread:$0]  %s47, 256, %s49, [#allocation4]
    $region13: #{tpu_custom_call.1} parent=1 // pred_fallthru
      _
    // Predicated region
    $region14: #{tpu_custom_call.1} parent=1 // pred_check
      _
    $region15: #{tpu_custom_call.1} parent=1 // pred_check_branch
      %53 = sbr.rel (0) target = $region17
    $region16: #{tpu_custom_call.1} parent=1 // pred_region
      %55 = dma.done [#allocation4], 256
    $region17: #{tpu_custom_call.1} parent=1 // pred_fallthru
      _
    %56 = vsyncpa [#allocation3], 1
    %57 = vsyncpa [#allocation4], 1

</llo_original>
